<compile_context>
chip_gen: v7x
topology: tpu7x:2x2x1
jax: 0.10.0
libtpu: 0.0.40
codegen_flags: <defaults>
</compile_context>

<pallas_src>
import functools

import jax
import jax.numpy as jnp
from jax.experimental import pallas as pl
from jax.experimental.pallas import tpu as pltpu


def _make_kernel(batch, tile_rows, subtract_avg, need_mask):
    inv_b = 1.0 / float(batch)  # compile-time constant

    def kernel(*refs):
        if subtract_avg:
            latent_ref, avg_ref, out_ref, acc_ref = refs
        else:
            latent_ref, out_ref, acc_ref = refs
            avg_ref = None

        t = pl.program_id(0)
        nt = pl.num_programs(0)

        @pl.when(t == 0)
        def _init():
            acc_ref[...] = jnp.zeros_like(acc_ref)

        # latent_ref block: (TB, F); avg_ref block: (1, F) (broadcast over rows)
        x = latent_ref[...].astype(jnp.float32)
        if subtract_avg:
            x = x - avg_ref[...].astype(jnp.float32)

        # Per-row sum of squares -> (TB, 1); single XLU reduce per row.
        sumsq = jnp.sum(x * x, axis=-1, keepdims=True)

        if need_mask:
            # Last tile may run past B; zero the contribution of padded rows.
            row = t * tile_rows + jax.lax.broadcasted_iota(
                jnp.int32, (tile_rows, 1), 0
            )
            sumsq = jnp.where(row < batch, sumsq, 0.0)

        norms = jnp.sqrt(sumsq)                       # (TB, 1) per-row L2 norms
        acc_ref[...] = acc_ref[...] + jnp.sum(norms)  # scalar accumulate (scratch)

        @pl.when(t == nt - 1)
        def _finalize():
            out_ref[...] = acc_ref[...] * inv_b

    return kernel


@functools.partial(jax.jit, static_argnames=("start_from_latent_avg",))
def w_norm_loss(latent, latent_avg=None, start_from_latent_avg=True):
    B, N, D = latent.shape
    F = N * D
    subtract_avg = bool(start_from_latent_avg) and (latent_avg is not None)

    lat2d = jnp.reshape(latent, (B, F))

    # Batch-tile size: ~1 MiB per input tile (x2 for double buffering), far
    # below the scoped-VMEM default on v5e/v6e/v7x; at least 8 rows (sublane
    # alignment) unless the whole batch fits in one block.
    itemsize = jnp.dtype(latent.dtype).itemsize
    target_bytes = 1 << 20
    tb = max(8, target_bytes // max(1, F * itemsize))
    tb = (int(tb) // 8) * 8
    if tb >= B:
        TB = B            # single tile: block == full array dims (always legal)
    else:
        TB = tb           # multiple of 8 -> legal block even with ragged last tile
    num_tiles = pl.cdiv(B, TB)
    need_mask = (num_tiles * TB != B)

    kernel = _make_kernel(B, TB, subtract_avg, need_mask)

    in_specs = [pl.BlockSpec((TB, F), lambda t: (t, 0))]
    inputs = [lat2d]
    if subtract_avg:
        avg2d = jnp.reshape(latent_avg, (1, F))
        in_specs.append(pl.BlockSpec((1, F), lambda t: (0, 0)))
        inputs.append(avg2d)

    out = pl.pallas_call(
        kernel,
        out_shape=jax.ShapeDtypeStruct((1, 1), jnp.float32),
        grid_spec=pltpu.PrefetchScalarGridSpec(
            num_scalar_prefetch=0,
            grid=(num_tiles,),
            in_specs=in_specs,
            out_specs=pl.BlockSpec((1, 1), lambda t: (0, 0)),
            scratch_shapes=[pltpu.VMEM((1, 1), jnp.float32)],
        ),
        compiler_params=pltpu.CompilerParams(
            dimension_semantics=("arbitrary",),  # accumulator resident over batch tiles
        ),
    )(*inputs)
    return out[0, 0]


class WNormLossNew:
    """JAX/Pallas port of WNormLoss_new."""

    def __init__(self, start_from_latent_avg=True):
        self.start_from_latent_avg = start_from_latent_avg
        # nn.BatchNorm2d(1) parameters — deterministic init, unused in forward
        # (kept only to mirror the PyTorch module's state).
        self.bn_weight = jnp.ones((1,), jnp.float32)
        self.bn_bias = jnp.zeros((1,), jnp.float32)
        self.bn_running_mean = jnp.zeros((1,), jnp.float32)
        self.bn_running_var = jnp.ones((1,), jnp.float32)

    def __call__(self, latent, latent_avg=None):
        return w_norm_loss(
            latent, latent_avg, start_from_latent_avg=self.start_from_latent_avg
        )


if __name__ == "__main__":
    key = jax.random.PRNGKey(0)
    k1, k2 = jax.random.split(key)

    B, N, D = 2, 8, 32
    latent = jax.random.normal(k1, (B, N, D), dtype=jnp.float32)
    latent_avg = jax.random.normal(k2, (N, D), dtype=jnp.float32)

    # Main path: start_from_latent_avg=True.
    loss_mod = WNormLossNew(start_from_latent_avg=True)
    loss = jax.block_until_ready(loss_mod(latent, latent_avg))

    diff = latent - latent_avg[None]
    ref = jnp.sum(jnp.sqrt(jnp.sum(diff * diff, axis=(1, 2)))) / B
    assert jnp.allclose(loss, ref, rtol=1e-5, atol=1e-5), (loss, ref)

    # Secondary path: no latent_avg subtraction.
    loss_mod2 = WNormLossNew(start_from_latent_avg=False)
    loss2 = jax.block_until_ready(loss_mod2(latent))
    ref2 = jnp.sum(jnp.sqrt(jnp.sum(latent * latent, axis=(1, 2)))) / B
    assert jnp.allclose(loss2, ref2, rtol=1e-5, atol=1e-5), (loss2, ref2)

    print("KERNEL_OK")
</pallas_src>

<mosaic_0001>
module attributes {stable_mosaic.version = 11 : i64} {
  func.func @kernel(%arg0: i32, %arg1: memref<2x256xf32, #tpu.memory_space<vmem>>, %arg2: memref<1x256xf32, #tpu.memory_space<vmem>>, %arg3: memref<1x1xf32, #tpu.memory_space<vmem>>, %arg4: memref<1x1xf32, #tpu.memory_space<vmem>>) attributes {dimension_semantics = [#tpu.dimension_semantics<arbitrary>], iteration_bounds = array<i64: 1>, scalar_prefetch = 0 : i64, scratch_operands = 1 : i64, tpu.core_type = #tpu.core_type<tc>, window_params = [{transform_indices = @transform_0, window_bounds = array<i64: 2, 256>}, {pipeline_mode = #tpu.pipeline_mode<synchronous>, transform_indices = @transform_1, window_bounds = array<i64: 1, 256>}, {pipeline_mode = #tpu.pipeline_mode<synchronous>, transform_indices = @transform_2, window_bounds = array<i64: 1, 1>}]} {
    %c0_i32 = arith.constant 0 : i32
    %0 = arith.cmpi eq, %arg0, %c0_i32 : i32
    %1 = arith.extui %0 : i1 to i32
    %c0_i32_0 = arith.constant 0 : i32
    %2 = arith.cmpi ne, %1, %c0_i32_0 : i32
    scf.if %2 {
      %cst_11 = arith.constant 0.000000e+00 : f32
      %22 = vector.broadcast %cst_11 : f32 to vector<1x1xf32>
      %c0_12 = arith.constant 0 : index
      %c0_13 = arith.constant 0 : index
      %23 = vector.load %arg4[%c0_12, %c0_13] : memref<1x1xf32, #tpu.memory_space<vmem>>, vector<1x1xf32>
      tpu.vector_store %arg4[%c0_12, %c0_13], %22 {strides = array<i32>} : memref<1x1xf32, #tpu.memory_space<vmem>>, vector<1x1xf32>,
    } else {
    }
    %c0 = arith.constant 0 : index
    %c0_1 = arith.constant 0 : index
    %3 = vector.load %arg1[%c0, %c0_1] : memref<2x256xf32, #tpu.memory_space<vmem>>, vector<2x256xf32>
    %c0_2 = arith.constant 0 : index
    %c0_3 = arith.constant 0 : index
    %4 = vector.load %arg2[%c0_2, %c0_3] : memref<1x256xf32, #tpu.memory_space<vmem>>, vector<1x256xf32>
    %5 = vector.broadcast %4 : vector<1x256xf32> to vector<2x256xf32>
    %6 = arith.subf %3, %5 : vector<2x256xf32>
    %7 = arith.mulf %6, %6 : vector<2x256xf32>
    %cst = arith.constant dense<0.000000e+00> : vector<2xf32>
    %8 = vector.multi_reduction <add>, %7, %cst [1] : vector<2x256xf32> to vector<2xf32>
    %9 = vector.shape_cast %8 : vector<2xf32> to vector<2x1xf32>
    %10 = math.sqrt %9 : vector<2x1xf32>
    %c0_4 = arith.constant 0 : index
    %c0_5 = arith.constant 0 : index
    %11 = vector.load %arg4[%c0_4, %c0_5] : memref<1x1xf32, #tpu.memory_space<vmem>>, vector<1x1xf32>
    %12 = vector.shape_cast %10 : vector<2x1xf32> to vector<1x2x1xf32>
    %cst_6 = arith.constant dense<0.000000e+00> : vector<1xf32>
    %13 = vector.multi_reduction <add>, %12, %cst_6 [1, 2] : vector<1x2x1xf32> to vector<1xf32>
    %14 = vector.shape_cast %13 : vector<1xf32> to vector<1x1x1xf32>
    %15 = vector.extract %14[0, 0, 0] : f32 from vector<1x1x1xf32>
    %16 = vector.broadcast %15 : f32 to vector<1x1xf32>
    %17 = arith.addf %11, %16 : vector<1x1xf32>
    %c0_7 = arith.constant 0 : index
    %c0_8 = arith.constant 0 : index
    %18 = vector.load %arg4[%c0_7, %c0_8] : memref<1x1xf32, #tpu.memory_space<vmem>>, vector<1x1xf32>
    tpu.vector_store %arg4[%c0_7, %c0_8], %17 {strides = array<i32>} : memref<1x1xf32, #tpu.memory_space<vmem>>, vector<1x1xf32>,
    %c0_i32_9 = arith.constant 0 : i32
    %19 = arith.cmpi eq, %arg0, %c0_i32_9 : i32
    %20 = arith.extui %19 : i1 to i32
    %c0_i32_10 = arith.constant 0 : i32
    %21 = arith.cmpi ne, %20, %c0_i32_10 : i32
    scf.if %21 {
      %c0_11 = arith.constant 0 : index
      %c0_12 = arith.constant 0 : index
      %22 = vector.load %arg4[%c0_11, %c0_12] : memref<1x1xf32, #tpu.memory_space<vmem>>, vector<1x1xf32>
      %cst_13 = arith.constant 5.000000e-01 : f32
      %23 = vector.broadcast %cst_13 : f32 to vector<1x1xf32>
      %24 = arith.mulf %22, %23 : vector<1x1xf32>
      %c0_14 = arith.constant 0 : index
      %c0_15 = arith.constant 0 : index
      %25 = vector.load %arg3[%c0_14, %c0_15] : memref<1x1xf32, #tpu.memory_space<vmem>>, vector<1x1xf32>
      tpu.vector_store %arg3[%c0_14, %c0_15], %24 {strides = array<i32>} : memref<1x1xf32, #tpu.memory_space<vmem>>, vector<1x1xf32>,
    } else {
    }
    return
  }
  func.func @transform_0(%arg0: i32) -> (i32, i32) {
    %c0_i32 = arith.constant 0 : i32
    %c0_i32_0 = arith.constant 0 : i32
    return %arg0, %c0_i32 : i32, i32
  }
  func.func @transform_1(%arg0: i32) -> (i32, i32) {
    %c0_i32 = arith.constant 0 : i32
    %c0_i32_0 = arith.constant 0 : i32
    %c0_i32_1 = arith.constant 0 : i32
    return %c0_i32, %c0_i32_0 : i32, i32
  }
  func.func @transform_2(%arg0: i32) -> (i32, i32) {
    %c0_i32 = arith.constant 0 : i32
    %c0_i32_0 = arith.constant 0 : i32
    %c0_i32_1 = arith.constant 0 : i32
    return %c0_i32, %c0_i32_0 : i32, i32
  }
}

</mosaic_0001>

<llo_original>
// kernel: w_norm_loss.1
$region0: #{w_norm_loss.1}
  #allocation0 [shape = 'u32[]', space=smem, size = 0x4, offset = 0x4, fixed_abs, tag = 'smem constant byte address 0x4 - core index']
  #allocation1 [shape = 'u32[144,128]{1,0:T(1,128)}', space=vmem, size = 0x12000, scoped, tag = 'internal scratch']
  #allocation2 [shape = 'f32[1,1]{1,0:T(1,128)}', space=vmem, size = 0x200, scoped, tag = 'scratch operand']
  %s0 = inlined_call_operand.vmem [shape: f32[2,256], index: 0, kind: input, shape index: {}]
  %s1 = inlined_call_operand.vmem [shape: f32[1,256], index: 1, kind: input, shape index: {}]
  %s2 = inlined_call_operand.hbm [shape: f32[1,1], index: 2, kind: output, shape index: {}]
  %s3 = sld [smem:[#allocation0]]
  $region26: #{w_norm_loss.1} parent=0
    _
  %s5 = ssub.s32 1, %s3
  %s6 = scalar_select 0, %s5, %s3
  $region1: #{w_norm_loss.1} parent=0
    #allocation3 [shape = 'u8[512]{0}', space=vmem, size = 0x400, scoped, tag = 'output window, operand 0, single buffered']
    #allocation4 [shape = 's32[1]{0}', space=sflag, size = 0x4, scoped, tag = 'scoped memory for w_norm_loss.1']
    %7 = vsyncpa [#allocation4], 0
    // Predicated region
    $region2: #{w_norm_loss.1} parent=1 // pred_check
      _
    $region3: #{w_norm_loss.1} parent=1 // pred_check_branch
      %9 = sbr.rel (0) target = $region5
    $region4: #{w_norm_loss.1} parent=1 // pred_region
      _
    $region5: #{w_norm_loss.1} parent=1 // pred_fallthru
      _
    // Predicated region
    $region6: #{w_norm_loss.1} parent=1 // pred_check
      _
    $region7: #{w_norm_loss.1} parent=1 // pred_check_branch
      %11 = sbr.rel (0) target = $region9
    $region8: #{w_norm_loss.1} parent=1 // pred_region
      _
    $region9: #{w_norm_loss.1} parent=1 // pred_fallthru
      _
    %p12 = scmp.eq.s32.totalorder 0, 0
    // Predicated region
    $region10: #{w_norm_loss.1} parent=1 // pred_check
      %p13 = pneg %p12
    $region11: #{w_norm_loss.1} parent=1 // pred_check_branch
      %15 = sbr.rel (%p13) target = $region13
    $region12: #{w_norm_loss.1} parent=1 // pred_region
      %vm16 = vcmask 0
      %17 = vst.msk [vmem:[#allocation2] sm:$0x1] %vm16, 0.0
    $region13: #{w_norm_loss.1} parent=1 // pred_fallthru
      _
    %v18 = vld [vmem:[%s0] sm:$0xf]
    %v19 = vld [vmem:[%s1] sm:$0x3]
    %v21 = vlaneseq
    %v22 = vshrl.u32 %v21, 7
    %v23 = vsub.s32 0, %v22
    %v24 = vrot.slane %v19, %v23
    %v25 = vlaneseq
    %v26 = vshrl.u32 %v25, 7
    %v27 = vsub.s32 1, %v26
    %v28 = vrot.slane %v19, %v27
    %v29 = vcombine.low %v24, %v28
    %v31 = vunpack.c.l.s4 1983009808
    %v32 = vunpack.c.0.s8 %v31
    %v33 = vlaneseq
    %v34 = vshrl.u32 %v33, 7
    %v35 = vsub.s32 %v32, %v34
    %v36 = vrot.slane %v29, %v35
    %v38 = vsub.f32 %v18, %v36
    %v39 = vmul.f32 %v38, %v38
    %v42 = vunpack.c.l.s4 1983009808
    %v43 = vunpack.c.0.s8 %v42
    %v44 = vlaneseq
    %v45 = vshrl.u32 %v44, 7
    %v46 = vsub.s32 %v43, %v45
    %v47 = vrot.slane %v39, %v46
    %v48 = vcombine.high %v47, %v47
    %vm51 = vcmask 1041408
    %v52 = vsel %vm51, %v47, 0.0
    %v53 = vsel %vm51, %v48, 0.0
    %v54 = vadd.f32 %v52, %v53
    %55 = vadd.xlane.f32.xlu0 %v54
    %v56 = vpop.xlane.xlu0 %55
    %v57 = vrsqrt.pop %v56
    %v58 = vmul.f32 %v56, %v57
    %vm59 = vcmp.eq.f32.partialorder %v56, inf
    %v60 = vsel %vm59, %v56, %v58
    %vm61 = vcmp.eq.f32.partialorder %v56, 0.0
    %v62 = vand.u32 %v56, 2147483648
    %v63 = vsel %vm61, %v62, %v60
    %v64 = vld [vmem:[#allocation2] sm:$0x1]
    %vm65 = vcmask 1024
    %v66 = vsel %vm65, %v63, 0.0
    %67 = vadd.xlane.f32.xlu0 %v66
    %v68 = vpop.xlane.xlu0 %67
    %v69 = vrot.slane %v68, 4
    %v70 = vadd.f32 %v68, %v69
    %v71 = vrot.slane %v70, 2
    %v72 = vadd.f32 %v70, %v71
    %v73 = vrot.slane %v72, 1
    %v74 = vadd.f32 %v72, %v73
    %s75 = vtos %v74
    %v76 = vstv %s75
    %v77 = vadd.f32 %v64, %v76
    %vm78 = vcmask 0
    %79 = vst.msk [vmem:[#allocation2] sm:$0x1] %vm78, %v77
    // Predicated region
    $region14: #{w_norm_loss.1} parent=1 // pred_check
      %p80 = pneg %p12
    $region15: #{w_norm_loss.1} parent=1 // pred_check_branch
      %82 = sbr.rel (%p80) target = $region17
    $region16: #{w_norm_loss.1} parent=1 // pred_region
      %v83 = vld [vmem:[#allocation2] sm:$0x1]
      %v84 = vmul.f32 %v83, 0.5
      %85 = vst.msk [vmem:[#allocation3] sm:$0x1] %vm78, %v84
    $region17: #{w_norm_loss.1} parent=1 // pred_fallthru
      _
    // Predicated region
    $region18: #{w_norm_loss.1} parent=1 // pred_check
      _
    $region19: #{w_norm_loss.1} parent=1 // pred_check_branch
      %87 = sbr.rel (0) target = $region21
    $region20: #{w_norm_loss.1} parent=1 // pred_region
      %s89 = ssub.s32 16, 16
      %90 = vsyncadd [#allocation4], %s89
      %s92 = sshll.u32 [#allocation3], 4
      %s93 = int_to_ptr.vmem [resolvable:$true] %s92
      %95 = dma.vmem_to_hbm [thread:$0]  %s93, 16, %s2, [#allocation4]
    $region21: #{w_norm_loss.1} parent=1 // pred_fallthru
      _
    // Predicated region
    $region22: #{w_norm_loss.1} parent=1 // pred_check
      _
    $region23: #{w_norm_loss.1} parent=1 // pred_check_branch
      %97 = sbr.rel (0) target = $region25
    $region24: #{w_norm_loss.1} parent=1 // pred_region
      %98 = dma.done [#allocation4], 16
    $region25: #{w_norm_loss.1} parent=1 // pred_fallthru
      _
    %99 = vsyncpa [#allocation4], 1

</llo_original>
